<compile_context>
chip_gen: v7x
topology: tpu7x:2x2x1
jax: 0.10.0
libtpu: 0.0.40
codegen_flags: <defaults>
</compile_context>

<pallas_src>
import jax
import jax.numpy as jnp
from jax.experimental import pallas as pl
from jax.experimental.pallas import tpu as pltpu


def _round_up(x, m):
    return (x + m - 1) // m * m


def _combiner_kernel(z_ref, h_ref, eps_ref,
                     w1_ref, b1_ref, wmu_ref, bmu_ref, wlv_ref, blv_ref,
                     out_ref):
    f32 = jnp.float32

    # Stage 1: z_to_hidden + tanh, combined with h_rnn.  MXU operands stay in
    # the I/O dtype (bf16 MXU path when the model is bf16); accumulate in f32.
    hidden = jnp.dot(z_ref[...], w1_ref[...], preferred_element_type=f32)
    hidden = hidden + b1_ref[...].astype(f32)
    h_comb = 0.5 * (jnp.tanh(hidden) + h_ref[...].astype(f32))        # [TB, H] f32

    # Stage 2: two separate [H, Z] projections.  Each result starts at lane 0,
    # so no cross-lane relayout is needed (unlike slicing a fused [TB, 2Z]).
    h_mm = h_comb.astype(wmu_ref.dtype)   # bf16 MXU operand when weights are bf16
    mu = jnp.dot(h_mm, wmu_ref[...], preferred_element_type=f32) \
        + bmu_ref[...].astype(f32)                                    # [TB, Z]
    logvar = jnp.dot(h_mm, wlv_ref[...], preferred_element_type=f32) \
        + blv_ref[...].astype(f32)                                    # [TB, Z]

    # Reparameterization.
    z_t = mu + eps_ref[...].astype(f32) * jnp.exp(0.5 * logvar)       # [TB, Z]

    # Single fused, lane-denser output tile: [z_t | mu | logvar] -> [TB, 3Z].
    out_ref[...] = jnp.concatenate([z_t, mu, logvar], axis=-1).astype(out_ref.dtype)


def combiner_forward(z_t_1, h_rnn, eps, params, *, block_b=None, return_fused=False):
    """params = dict(w1 [Z,H], b1 [1,H], wmu [H,Z], bmu [1,Z], wlv [H,Z], blv [1,Z]).

    Returns (z_t, mu, logvar), or the fused [B, 3Z] buffer if return_fused=True
    (preferred for downstream consumers: avoids the post-kernel split copies).
    """
    B, Z = z_t_1.shape
    H = h_rnn.shape[-1]
    act_dtype = z_t_1.dtype
    itemsize = jnp.dtype(act_dtype).itemsize
    sub = max(8, 32 // itemsize)          # sublane multiple: 8 f32, 16 bf16
    LANE = 128

    # Lane-padded widths of each VMEM tile buffer (what actually occupies VMEM).
    Zp = _round_up(Z, LANE)
    Hp = _round_up(H, LANE)
    Op = _round_up(3 * Z, LANE)

    if block_b is None:
        # Derive TB from a conservative VMEM tile budget (fits v5e/v6e/v7x):
        #   double-buffered I/O blocks + in-kernel f32 temporaries.
        TILE_BUDGET = 16 * 1024 * 1024
        io_row = 2 * itemsize * (2 * Zp + Hp + Op)   # z, eps, h, fused out (x2 buffers)
        tmp_row = 4 * (2 * Hp + 5 * Zp)              # hidden/h_comb + mu/logvar/z_t/...
        block_b = max(sub, TILE_BUDGET // (io_row + tmp_row))
        # Prefer >= ~4 grid steps when the batch allows it: gives the BlockSpec
        # pipeline something to overlap and lets v7x shard the batch axis
        # across both TensorCores.
        block_b = min(block_b, max(sub, -(-B // 4)))

    TB = _round_up(max(1, min(int(block_b), B)), sub)
    n_tiles = pl.cdiv(B, TB)   # last tile may be partial: Pallas masks OOB rows

    out = pl.pallas_call(
        _combiner_kernel,
        grid=(n_tiles,),
        in_specs=[
            pl.BlockSpec((TB, Z), lambda i: (i, 0)),    # z_t_1   (batch-tiled)
            pl.BlockSpec((TB, H), lambda i: (i, 0)),    # h_rnn   (batch-tiled)
            pl.BlockSpec((TB, Z), lambda i: (i, 0)),    # eps     (batch-tiled)
            pl.BlockSpec((Z, H), lambda i: (0, 0)),     # w1      (resident)
            pl.BlockSpec((1, H), lambda i: (0, 0)),     # b1      (resident)
            pl.BlockSpec((H, Z), lambda i: (0, 0)),     # wmu     (resident)
            pl.BlockSpec((1, Z), lambda i: (0, 0)),     # bmu     (resident)
            pl.BlockSpec((H, Z), lambda i: (0, 0)),     # wlv     (resident)
            pl.BlockSpec((1, Z), lambda i: (0, 0)),     # blv     (resident)
        ],
        out_specs=pl.BlockSpec((TB, 3 * Z), lambda i: (i, 0)),   # fused [z_t|mu|logvar]
        out_shape=jax.ShapeDtypeStruct((B, 3 * Z), act_dtype),
        compiler_params=pltpu.CompilerParams(
            dimension_semantics=("parallel",),
            vmem_limit_bytes=48 * 1024 * 1024,
        ),
    )(z_t_1, h_rnn, eps,
      params["w1"], params["b1"],
      params["wmu"], params["bmu"],
      params["wlv"], params["blv"])

    if return_fused:
        return out
    z_t = out[:, :Z]
    mu = out[:, Z:2 * Z]
    logvar = out[:, 2 * Z:]
    return z_t, mu, logvar


def _reference(z_t_1, h_rnn, eps, p):
    f32 = jnp.float32
    z = z_t_1.astype(f32)
    h = h_rnn.astype(f32)
    e = eps.astype(f32)
    w1, b1 = p["w1"].astype(f32), p["b1"].astype(f32)
    wmu, bmu = p["wmu"].astype(f32), p["bmu"].astype(f32)
    wlv, blv = p["wlv"].astype(f32), p["blv"].astype(f32)
    h_combined = 0.5 * (jnp.tanh(z @ w1 + b1) + h)
    mu = h_combined @ wmu + bmu
    logvar = h_combined @ wlv + blv
    z_t = mu + e * jnp.exp(0.5 * logvar)
    return z_t, mu, logvar


def _make_inputs(key, B, Z, H):
    ks = jax.random.split(key, 9)
    params = {
        "w1":  0.1 * jax.random.normal(ks[0], (Z, H), jnp.float32),
        "b1":  0.1 * jax.random.normal(ks[1], (1, H), jnp.float32),
        "wmu": 0.1 * jax.random.normal(ks[2], (H, Z), jnp.float32),
        "bmu": 0.1 * jax.random.normal(ks[3], (1, Z), jnp.float32),
        "wlv": 0.1 * jax.random.normal(ks[4], (H, Z), jnp.float32),
        "blv": 0.1 * jax.random.normal(ks[5], (1, Z), jnp.float32),
    }
    z_t_1 = jax.random.normal(ks[6], (B, Z), jnp.float32)
    h_rnn = jax.random.normal(ks[7], (B, H), jnp.float32)
    # TODO(synk): torch.randn is generated inside forward(); here the N(0,I)
    # noise is supplied as an explicit input for determinism/testability.
    eps = jax.random.normal(ks[8], (B, Z), jnp.float32)
    return z_t_1, h_rnn, eps, params


def _check(z_t_1, h_rnn, eps, params, *, atol=1e-5, rtol=1e-5, **kw):
    z_t, mu, logvar = combiner_forward(z_t_1, h_rnn, eps, params, **kw)
    jax.block_until_ready((z_t, mu, logvar))
    z_ref, mu_ref, lv_ref = _reference(z_t_1, h_rnn, eps, params)
    for got, want in ((z_t, z_ref), (mu, mu_ref), (logvar, lv_ref)):
        assert jnp.allclose(got.astype(jnp.float32), want, atol=atol, rtol=rtol), (
            float(jnp.max(jnp.abs(got.astype(jnp.float32) - want))))


if __name__ == "__main__":
    Z, H = 8, 32  # z_dim, hid_dim

    key = jax.random.PRNGKey(0)
    k1, k2, k3, k4 = jax.random.split(key, 4)

    # Auto tile size (single tile), f32.
    _check(*_make_inputs(k1, 8, Z, H))

    # Multi-tile grid: exercises the batch grid / resident-weight index maps.
    _check(*_make_inputs(k2, 24, Z, H), block_b=8)

    # Non-divisible batch: partial last tile handled by Pallas edge masking
    # (no jnp.pad of the activations).
    _check(*_make_inputs(k3, 20, Z, H), block_b=8)

    # Fused-output path (downstream consumers should use this to avoid splits).
    z1, h1, e1, p1 = _make_inputs(k1, 8, Z, H)
    fused = combiner_forward(z1, h1, e1, p1, return_fused=True)
    jax.block_until_ready(fused)
    assert fused.shape == (8, 3 * Z)

    # bf16 I/O end-to-end (internal math stays f32; TB is forced to a multiple
    # of 16 for bf16 sublane packing; loose tolerances for bf16 rounding).
    zb, hb, eb, pf = _make_inputs(k4, 32, Z, H)
    zb, hb, eb = (x.astype(jnp.bfloat16) for x in (zb, hb, eb))
    pb = {k: v.astype(jnp.bfloat16) for k, v in pf.items()}
    _check(zb, hb, eb, pb, block_b=16, atol=5e-2, rtol=5e-2)

    print("KERNEL_OK")
</pallas_src>

<mosaic_0001>
module attributes {stable_mosaic.version = 11 : i64} {
  func.func @_combiner_kernel(%arg0: i32, %arg1: memref<8x8xf32, #tpu.memory_space<vmem>>, %arg2: memref<8x32xf32, #tpu.memory_space<vmem>>, %arg3: memref<8x8xf32, #tpu.memory_space<vmem>>, %arg4: memref<8x32xf32, #tpu.memory_space<vmem>>, %arg5: memref<1x32xf32, #tpu.memory_space<vmem>>, %arg6: memref<32x8xf32, #tpu.memory_space<vmem>>, %arg7: memref<1x8xf32, #tpu.memory_space<vmem>>, %arg8: memref<32x8xf32, #tpu.memory_space<vmem>>, %arg9: memref<1x8xf32, #tpu.memory_space<vmem>>, %arg10: memref<8x24xf32, #tpu.memory_space<vmem>>) attributes {dimension_semantics = [#tpu.dimension_semantics<parallel>], iteration_bounds = array<i64: 1>, scalar_prefetch = 0 : i64, scratch_operands = 0 : i64, tpu.core_type = #tpu.core_type<tc>, window_params = [{transform_indices = @transform_0, window_bounds = array<i64: 8, 8>}, {transform_indices = @transform_1, window_bounds = array<i64: 8, 32>}, {transform_indices = @transform_2, window_bounds = array<i64: 8, 8>}, {pipeline_mode = #tpu.pipeline_mode<synchronous>, transform_indices = @transform_3, window_bounds = array<i64: 8, 32>}, {pipeline_mode = #tpu.pipeline_mode<synchronous>, transform_indices = @transform_4, window_bounds = array<i64: 1, 32>}, {pipeline_mode = #tpu.pipeline_mode<synchronous>, transform_indices = @transform_5, window_bounds = array<i64: 32, 8>}, {pipeline_mode = #tpu.pipeline_mode<synchronous>, transform_indices = @transform_6, window_bounds = array<i64: 1, 8>}, {pipeline_mode = #tpu.pipeline_mode<synchronous>, transform_indices = @transform_7, window_bounds = array<i64: 32, 8>}, {pipeline_mode = #tpu.pipeline_mode<synchronous>, transform_indices = @transform_8, window_bounds = array<i64: 1, 8>}, {transform_indices = @transform_9, window_bounds = array<i64: 8, 24>}]} {
    %c0 = arith.constant 0 : index
    %c0_0 = arith.constant 0 : index
    %0 = vector.load %arg1[%c0, %c0_0] : memref<8x8xf32, #tpu.memory_space<vmem>>, vector<8x8xf32>
    %c0_1 = arith.constant 0 : index
    %c0_2 = arith.constant 0 : index
    %1 = vector.load %arg4[%c0_1, %c0_2] : memref<8x32xf32, #tpu.memory_space<vmem>>, vector<8x32xf32>
    %cst = arith.constant dense<0.000000e+00> : vector<8x32xf32>
    %2 = tpu.matmul %0, %1, %cst {dimension_numbers = #tpu.dot_dimension_numbers<[1], [0], [0], [1], [0, 0, 1, 1], [], []>} : vector<8x8xf32>, vector<8x32xf32>, vector<8x32xf32> -> vector<8x32xf32>
    %c0_3 = arith.constant 0 : index
    %c0_4 = arith.constant 0 : index
    %3 = vector.load %arg5[%c0_3, %c0_4] : memref<1x32xf32, #tpu.memory_space<vmem>>, vector<1x32xf32>
    %4 = vector.broadcast %3 : vector<1x32xf32> to vector<8x32xf32>
    %5 = arith.addf %2, %4 : vector<8x32xf32>
    %6 = math.tanh %5 : vector<8x32xf32>
    %c0_5 = arith.constant 0 : index
    %c0_6 = arith.constant 0 : index
    %7 = vector.load %arg2[%c0_5, %c0_6] : memref<8x32xf32, #tpu.memory_space<vmem>>, vector<8x32xf32>
    %8 = arith.addf %6, %7 : vector<8x32xf32>
    %cst_7 = arith.constant 5.000000e-01 : f32
    %9 = vector.broadcast %cst_7 : f32 to vector<8x32xf32>
    %10 = arith.mulf %9, %8 : vector<8x32xf32>
    %c0_8 = arith.constant 0 : index
    %c0_9 = arith.constant 0 : index
    %11 = vector.load %arg6[%c0_8, %c0_9] : memref<32x8xf32, #tpu.memory_space<vmem>>, vector<32x8xf32>
    %cst_10 = arith.constant dense<0.000000e+00> : vector<8x8xf32>
    %12 = tpu.matmul %10, %11, %cst_10 {dimension_numbers = #tpu.dot_dimension_numbers<[1], [0], [0], [1], [0, 0, 1, 1], [], []>} : vector<8x32xf32>, vector<32x8xf32>, vector<8x8xf32> -> vector<8x8xf32>
    %c0_11 = arith.constant 0 : index
    %c0_12 = arith.constant 0 : index
    %13 = vector.load %arg7[%c0_11, %c0_12] : memref<1x8xf32, #tpu.memory_space<vmem>>, vector<1x8xf32>
    %14 = vector.broadcast %13 : vector<1x8xf32> to vector<8x8xf32>
    %15 = arith.addf %12, %14 : vector<8x8xf32>
    %c0_13 = arith.constant 0 : index
    %c0_14 = arith.constant 0 : index
    %16 = vector.load %arg8[%c0_13, %c0_14] : memref<32x8xf32, #tpu.memory_space<vmem>>, vector<32x8xf32>
    %cst_15 = arith.constant dense<0.000000e+00> : vector<8x8xf32>
    %17 = tpu.matmul %10, %16, %cst_15 {dimension_numbers = #tpu.dot_dimension_numbers<[1], [0], [0], [1], [0, 0, 1, 1], [], []>} : vector<8x32xf32>, vector<32x8xf32>, vector<8x8xf32> -> vector<8x8xf32>
    %c0_16 = arith.constant 0 : index
    %c0_17 = arith.constant 0 : index
    %18 = vector.load %arg9[%c0_16, %c0_17] : memref<1x8xf32, #tpu.memory_space<vmem>>, vector<1x8xf32>
    %19 = vector.broadcast %18 : vector<1x8xf32> to vector<8x8xf32>
    %20 = arith.addf %17, %19 : vector<8x8xf32>
    %c0_18 = arith.constant 0 : index
    %c0_19 = arith.constant 0 : index
    %21 = vector.load %arg3[%c0_18, %c0_19] : memref<8x8xf32, #tpu.memory_space<vmem>>, vector<8x8xf32>
    %cst_20 = arith.constant 5.000000e-01 : f32
    %22 = vector.broadcast %cst_20 : f32 to vector<8x8xf32>
    %23 = arith.mulf %22, %20 : vector<8x8xf32>
    %24 = math.exp %23 : vector<8x8xf32>
    %25 = arith.mulf %21, %24 : vector<8x8xf32>
    %26 = arith.addf %15, %25 : vector<8x8xf32>
    %27 = tpu.concatenate %26, %15, %20 in 1 : vector<8x8xf32>, vector<8x8xf32>, vector<8x8xf32> -> vector<8x24xf32>
    %c0_21 = arith.constant 0 : index
    %c0_22 = arith.constant 0 : index
    %28 = vector.load %arg10[%c0_21, %c0_22] : memref<8x24xf32, #tpu.memory_space<vmem>>, vector<8x24xf32>
    tpu.vector_store %arg10[%c0_21, %c0_22], %27 {strides = array<i32>} : memref<8x24xf32, #tpu.memory_space<vmem>>, vector<8x24xf32>,
    return
  }
  func.func @transform_0(%arg0: i32) -> (i32, i32) {
    %c0_i32 = arith.constant 0 : i32
    %c0_i32_0 = arith.constant 0 : i32
    return %arg0, %c0_i32 : i32, i32
  }
  func.func @transform_1(%arg0: i32) -> (i32, i32) {
    %c0_i32 = arith.constant 0 : i32
    %c0_i32_0 = arith.constant 0 : i32
    return %arg0, %c0_i32 : i32, i32
  }
  func.func @transform_2(%arg0: i32) -> (i32, i32) {
    %c0_i32 = arith.constant 0 : i32
    %c0_i32_0 = arith.constant 0 : i32
    return %arg0, %c0_i32 : i32, i32
  }
  func.func @transform_3(%arg0: i32) -> (i32, i32) {
    %c0_i32 = arith.constant 0 : i32
    %c0_i32_0 = arith.constant 0 : i32
    %c0_i32_1 = arith.constant 0 : i32
    return %c0_i32, %c0_i32_0 : i32, i32
  }
  func.func @transform_4(%arg0: i32) -> (i32, i32) {
    %c0_i32 = arith.constant 0 : i32
    %c0_i32_0 = arith.constant 0 : i32
    %c0_i32_1 = arith.constant 0 : i32
    return %c0_i32, %c0_i32_0 : i32, i32
  }
  func.func @transform_5(%arg0: i32) -> (i32, i32) {
    %c0_i32 = arith.constant 0 : i32
    %c0_i32_0 = arith.constant 0 : i32
    %c0_i32_1 = arith.constant 0 : i32
    return %c0_i32, %c0_i32_0 : i32, i32
  }
  func.func @transform_6(%arg0: i32) -> (i32, i32) {
    %c0_i32 = arith.constant 0 : i32
    %c0_i32_0 = arith.constant 0 : i32
    %c0_i32_1 = arith.constant 0 : i32
    return %c0_i32, %c0_i32_0 : i32, i32
  }
  func.func @transform_7(%arg0: i32) -> (i32, i32) {
    %c0_i32 = arith.constant 0 : i32
    %c0_i32_0 = arith.constant 0 : i32
    %c0_i32_1 = arith.constant 0 : i32
    return %c0_i32, %c0_i32_0 : i32, i32
  }
  func.func @transform_8(%arg0: i32) -> (i32, i32) {
    %c0_i32 = arith.constant 0 : i32
    %c0_i32_0 = arith.constant 0 : i32
    %c0_i32_1 = arith.constant 0 : i32
    return %c0_i32, %c0_i32_0 : i32, i32
  }
  func.func @transform_9(%arg0: i32) -> (i32, i32) {
    %c0_i32 = arith.constant 0 : i32
    %c0_i32_0 = arith.constant 0 : i32
    return %arg0, %c0_i32 : i32, i32
  }
}

</mosaic_0001>

<llo_original>
// kernel: tpu_custom_call.1
$region0: #{tpu_custom_call.1}
  #allocation0 [shape = 'u32[]', space=smem, size = 0x4, offset = 0x4, fixed_abs, tag = 'smem constant byte address 0x4 - core index']
  #allocation1 [shape = 'u32[144,128]{1,0:T(1,128)}', space=vmem, size = 0x12000, scoped, tag = 'internal scratch']
  %s0 = inlined_call_operand.vmem [shape: f32[8,8], index: 0, kind: input, shape index: {}]
  %s1 = inlined_call_operand.vmem [shape: f32[8,32], index: 1, kind: input, shape index: {}]
  %s2 = inlined_call_operand.vmem [shape: f32[8,8], index: 2, kind: input, shape index: {}]
  %s3 = inlined_call_operand.vmem [shape: f32[8,32], index: 3, kind: input, shape index: {}]
  %s4 = inlined_call_operand.vmem [shape: f32[1,32], index: 4, kind: input, shape index: {}]
  %s5 = inlined_call_operand.vmem [shape: f32[32,8], index: 5, kind: input, shape index: {}]
  %s6 = inlined_call_operand.vmem [shape: f32[1,8], index: 6, kind: input, shape index: {}]
  %s7 = inlined_call_operand.vmem [shape: f32[32,8], index: 7, kind: input, shape index: {}]
  %s8 = inlined_call_operand.vmem [shape: f32[1,8], index: 8, kind: input, shape index: {}]
  %s9 = inlined_call_operand.hbm [shape: f32[8,24], index: 9, kind: output, shape index: {}]
  %s10 = sld [smem:[#allocation0]]
  $region46: #{tpu_custom_call.1} parent=0
    _
  %s12 = ssub.s32 1, %s10
  %s13 = scalar_select 0, %s12, %s10
  $region1: #{tpu_custom_call.1} parent=0
    #allocation2 [shape = 'u8[4096]{0}', space=vmem, size = 0x1000, scoped, tag = 'output window, operand 0, single buffered']
    #allocation3 [shape = 's32[1]{0}', space=sflag, size = 0x4, scoped, tag = 'scoped memory for tpu_custom_call.1']
    %14 = vsyncpa [#allocation3], 0
    // Predicated region
    $region2: #{tpu_custom_call.1} parent=1 // pred_check
      _
    $region3: #{tpu_custom_call.1} parent=1 // pred_check_branch
      %16 = sbr.rel (0) target = $region5
    $region4: #{tpu_custom_call.1} parent=1 // pred_region
      _
    $region5: #{tpu_custom_call.1} parent=1 // pred_fallthru
      _
    // Predicated region
    $region6: #{tpu_custom_call.1} parent=1 // pred_check
      _
    $region7: #{tpu_custom_call.1} parent=1 // pred_check_branch
      %18 = sbr.rel (0) target = $region9
    $region8: #{tpu_custom_call.1} parent=1 // pred_region
      _
    $region9: #{tpu_custom_call.1} parent=1 // pred_fallthru
      _
    // Predicated region
    $region10: #{tpu_custom_call.1} parent=1 // pred_check
      _
    $region11: #{tpu_custom_call.1} parent=1 // pred_check_branch
      %20 = sbr.rel (0) target = $region13
    $region12: #{tpu_custom_call.1} parent=1 // pred_region
      _
    $region13: #{tpu_custom_call.1} parent=1 // pred_fallthru
      _
    // Predicated region
    $region14: #{tpu_custom_call.1} parent=1 // pred_check
      _
    $region15: #{tpu_custom_call.1} parent=1 // pred_check_branch
      %22 = sbr.rel (0) target = $region17
    $region16: #{tpu_custom_call.1} parent=1 // pred_region
      _
    $region17: #{tpu_custom_call.1} parent=1 // pred_fallthru
      _
    // Predicated region
    $region18: #{tpu_custom_call.1} parent=1 // pred_check
      _
    $region19: #{tpu_custom_call.1} parent=1 // pred_check_branch
      %24 = sbr.rel (0) target = $region21
    $region20: #{tpu_custom_call.1} parent=1 // pred_region
      _
    $region21: #{tpu_custom_call.1} parent=1 // pred_fallthru
      _
    // Predicated region
    $region22: #{tpu_custom_call.1} parent=1 // pred_check
      _
    $region23: #{tpu_custom_call.1} parent=1 // pred_check_branch
      %26 = sbr.rel (0) target = $region25
    $region24: #{tpu_custom_call.1} parent=1 // pred_region
      _
    $region25: #{tpu_custom_call.1} parent=1 // pred_fallthru
      _
    // Predicated region
    $region26: #{tpu_custom_call.1} parent=1 // pred_check
      _
    $region27: #{tpu_custom_call.1} parent=1 // pred_check_branch
      %28 = sbr.rel (0) target = $region29
    $region28: #{tpu_custom_call.1} parent=1 // pred_region
      _
    $region29: #{tpu_custom_call.1} parent=1 // pred_fallthru
      _
    // Predicated region
    $region30: #{tpu_custom_call.1} parent=1 // pred_check
      _
    $region31: #{tpu_custom_call.1} parent=1 // pred_check_branch
      %30 = sbr.rel (0) target = $region33
    $region32: #{tpu_custom_call.1} parent=1 // pred_region
      _
    $region33: #{tpu_custom_call.1} parent=1 // pred_fallthru
      _
    // Predicated region
    $region34: #{tpu_custom_call.1} parent=1 // pred_check
      _
    $region35: #{tpu_custom_call.1} parent=1 // pred_check_branch
      %32 = sbr.rel (0) target = $region37
    $region36: #{tpu_custom_call.1} parent=1 // pred_region
      _
    $region37: #{tpu_custom_call.1} parent=1 // pred_fallthru
      _
    %v33 = vld [vmem:[%s0] sm:$0xff]
    %v34 = vld [vmem:[%s3] sm:$0xff]
    %v35 = vld [vmem:[%s4] sm:$0x1]
    %v37 = vlaneseq
    %v38 = vshrl.u32 %v37, 7
    %v39 = vsub.s32 0, %v38
    %v40 = vrot.slane %v35, %v39
    %vm42 = vcmask 64512
    %v44 = vsel %vm42, %v33, 0
    %46 = vmatprep.subr.mxu0 0.0
    %47 = vmatpush1.msra.mxu0 %v34
    %48 = vmatprep.subr.mxu0 0.0
    %49 = vmatpush1.msra.mxu0 0.0
    %50 = vmatprep.subr.mxu0 0.0
    %51 = vmatpush1.msra.mxu0 0.0
    %52 = vmatprep.subr.mxu0 0.0
    %53 = vmatpush1.msra.mxu0 0.0
    %54 = vmatprep.subr.mxu0 0.0
    %55 = vmatpush1.msra.mxu0 0.0
    %56 = vmatprep.subr.mxu0 0.0
    %57 = vmatpush1.msra.mxu0 0.0
    %58 = vmatprep.subr.mxu0 0.0
    %59 = vmatpush1.msra.mxu0 0.0
    %60 = vmatprep.subr.mxu0 0.0
    %61 = vmatpush1.msra.mxu0 0.0
    %62 = vmatprep.subr.mxu0 0.0
    %63 = vmatpush1.msra.mxu0 0.0
    %64 = vmatprep.subr.mxu0 0.0
    %65 = vmatpush1.msra.mxu0 0.0
    %66 = vmatprep.subr.mxu0 0.0
    %67 = vmatpush1.msra.mxu0 0.0
    %68 = vmatprep.subr.mxu0 0.0
    %69 = vmatpush1.msra.mxu0 0.0
    %70 = vmatprep.subr.mxu0 0.0
    %71 = vmatpush1.msra.mxu0 0.0
    %72 = vmatprep.subr.mxu0 0.0
    %73 = vmatpush1.msra.mxu0 0.0
    %74 = vmatprep.subr.mxu0 0.0
    %75 = vmatpush1.msra.mxu0 0.0
    %76 = vmatprep.subr.mxu0 0.0
    %77 = vmatpush1.msra.mxu0 0.0
    %78 = vmatprep.subr.mxu0 0.0
    %79 = vmatpush1.msra.mxu0 0.0
    %80 = vmatprep.subr.mxu0 0.0
    %81 = vmatpush1.msra.mxu0 0.0
    %82 = vmatprep.subr.mxu0 0.0
    %83 = vmatpush1.msra.mxu0 0.0
    %84 = vmatprep.subr.mxu0 0.0
    %85 = vmatpush1.msra.mxu0 0.0
    %86 = vmatprep.subr.mxu0 0.0
    %87 = vmatpush1.msra.mxu0 0.0
    %88 = vmatprep.subr.mxu0 0.0
    %89 = vmatpush1.msra.mxu0 0.0
    %90 = vmatprep.subr.mxu0 0.0
    %91 = vmatpush1.msra.mxu0 0.0
    %92 = vmatprep.subr.mxu0 0.0
    %93 = vmatpush1.msra.mxu0 0.0
    %94 = vmatprep.subr.mxu0 0.0
    %95 = vmatpush1.msra.mxu0 0.0
    %96 = vmatprep.subr.mxu0 0.0
    %97 = vmatpush1.msra.mxu0 0.0
    %98 = vmatprep.subr.mxu0 0.0
    %99 = vmatpush1.msra.mxu0 0.0
    %100 = vmatprep.subr.mxu0 0.0
    %101 = vmatpush1.msra.mxu0 0.0
    %102 = vmatprep.subr.mxu0 0.0
    %103 = vmatpush1.msra.mxu0 0.0
    %104 = vmatprep.subr.mxu0 0.0
    %105 = vmatpush1.msra.mxu0 0.0
    %106 = vmatprep.subr.mxu0 0.0
    %107 = vmatpush1.msra.mxu0 0.0
    %108 = vmatprep.subr.mxu0 0.0
    %109 = vmatpush1.msra.mxu0 0.0
    %110 = vmatprep.mubr.f32.mxu0 0.0
    %111 = vmatmul.mubr.f32.gmra.mrb[0].mxu0 %v44
    %v112 = vpop.f32.mrb[0].mxu0
    %v113 = vadd.f32 %v40, %v112
    %v114 = vpop.f32.mrb[0].mxu0
    %115 = vdwg.mxu0
    %v116 = vtanh.pop %v113
    %v117 = vld [vmem:[%s1] sm:$0xff]
    %v118 = vadd.f32 %v116, %v117
    %v119 = vmul.f32 %v118, 0.5
    %v120 = vld [vmem:[%s5] sm:$0xff]
    %v121 = vld [vmem:[%s5 + $0x8] sm:$0xff]
    %v122 = vld [vmem:[%s5 + $0x10] sm:$0xff]
    %v123 = vld [vmem:[%s5 + $0x18] sm:$0xff]
    %v124 = vld [vmem:[%s6] sm:$0x1]
    %v126 = vlaneseq
    %v127 = vshrl.u32 %v126, 7
    %v128 = vsub.s32 0, %v127
    %v129 = vrot.slane %v124, %v128
    %vm131 = vcmask 261120
    %v133 = vsel %vm131, %v119, 0
    %135 = vmatprep.subr.mxu0 0.0
    %136 = vmatpush1.msra.mxu0 %v120
    %137 = vmatprep.subr.mxu0 0.0
    %138 = vmatpush1.msra.mxu0 %v121
    %139 = vmatprep.subr.mxu0 0.0
    %140 = vmatpush1.msra.mxu0 %v122
    %141 = vmatprep.subr.mxu0 0.0
    %142 = vmatpush1.msra.mxu0 %v123
    %143 = vmatprep.subr.mxu0 0.0
    %144 = vmatpush1.msra.mxu0 0.0
    %145 = vmatprep.subr.mxu0 0.0
    %146 = vmatpush1.msra.mxu0 0.0
    %147 = vmatprep.subr.mxu0 0.0
    %148 = vmatpush1.msra.mxu0 0.0
    %149 = vmatprep.subr.mxu0 0.0
    %150 = vmatpush1.msra.mxu0 0.0
    %151 = vmatprep.subr.mxu0 0.0
    %152 = vmatpush1.msra.mxu0 0.0
    %153 = vmatprep.subr.mxu0 0.0
    %154 = vmatpush1.msra.mxu0 0.0
    %155 = vmatprep.subr.mxu0 0.0
    %156 = vmatpush1.msra.mxu0 0.0
    %157 = vmatprep.subr.mxu0 0.0
    %158 = vmatpush1.msra.mxu0 0.0
    %159 = vmatprep.subr.mxu0 0.0
    %160 = vmatpush1.msra.mxu0 0.0
    %161 = vmatprep.subr.mxu0 0.0
    %162 = vmatpush1.msra.mxu0 0.0
    %163 = vmatprep.subr.mxu0 0.0
    %164 = vmatpush1.msra.mxu0 0.0
    %165 = vmatprep.subr.mxu0 0.0
    %166 = vmatpush1.msra.mxu0 0.0
    %167 = vmatprep.subr.mxu0 0.0
    %168 = vmatpush1.msra.mxu0 0.0
    %169 = vmatprep.subr.mxu0 0.0
    %170 = vmatpush1.msra.mxu0 0.0
    %171 = vmatprep.subr.mxu0 0.0
    %172 = vmatpush1.msra.mxu0 0.0
    %173 = vmatprep.subr.mxu0 0.0
    %174 = vmatpush1.msra.mxu0 0.0
    %175 = vmatprep.subr.mxu0 0.0
    %176 = vmatpush1.msra.mxu0 0.0
    %177 = vmatprep.subr.mxu0 0.0
    %178 = vmatpush1.msra.mxu0 0.0
    %179 = vmatprep.subr.mxu0 0.0
    %180 = vmatpush1.msra.mxu0 0.0
    %181 = vmatprep.subr.mxu0 0.0
    %182 = vmatpush1.msra.mxu0 0.0
    %183 = vmatprep.subr.mxu0 0.0
    %184 = vmatpush1.msra.mxu0 0.0
    %185 = vmatprep.subr.mxu0 0.0
    %186 = vmatpush1.msra.mxu0 0.0
    %187 = vmatprep.subr.mxu0 0.0
    %188 = vmatpush1.msra.mxu0 0.0
    %189 = vmatprep.subr.mxu0 0.0
    %190 = vmatpush1.msra.mxu0 0.0
    %191 = vmatprep.subr.mxu0 0.0
    %192 = vmatpush1.msra.mxu0 0.0
    %193 = vmatprep.subr.mxu0 0.0
    %194 = vmatpush1.msra.mxu0 0.0
    %195 = vmatprep.subr.mxu0 0.0
    %196 = vmatpush1.msra.mxu0 0.0
    %197 = vmatprep.subr.mxu0 0.0
    %198 = vmatpush1.msra.mxu0 0.0
    %199 = vmatprep.mubr.f32.mxu0 0.0
    %200 = vmatmul.mubr.f32.gmra.mrb[0].mxu0 %v133
    %v201 = vpop.f32.mrb[0].mxu0
    %v202 = vadd.f32 %v129, %v201
    %v203 = vpop.f32.mrb[0].mxu0
    %204 = vdwg.mxu0
    %v205 = vld [vmem:[%s7] sm:$0xff]
    %v206 = vld [vmem:[%s7 + $0x8] sm:$0xff]
    %v207 = vld [vmem:[%s7 + $0x10] sm:$0xff]
    %v208 = vld [vmem:[%s7 + $0x18] sm:$0xff]
    %v209 = vld [vmem:[%s8] sm:$0x1]
    %v211 = vlaneseq
    %v212 = vshrl.u32 %v211, 7
    %v213 = vsub.s32 0, %v212
    %v214 = vrot.slane %v209, %v213
    %216 = vmatprep.subr.mxu0 0.0
    %217 = vmatpush1.msra.mxu0 %v205
    %218 = vmatprep.subr.mxu0 0.0
    %219 = vmatpush1.msra.mxu0 %v206
    %220 = vmatprep.subr.mxu0 0.0
    %221 = vmatpush1.msra.mxu0 %v207
    %222 = vmatprep.subr.mxu0 0.0
    %223 = vmatpush1.msra.mxu0 %v208
    %224 = vmatprep.subr.mxu0 0.0
    %225 = vmatpush1.msra.mxu0 0.0
    %226 = vmatprep.subr.mxu0 0.0
    %227 = vmatpush1.msra.mxu0 0.0
    %228 = vmatprep.subr.mxu0 0.0
    %229 = vmatpush1.msra.mxu0 0.0
    %230 = vmatprep.subr.mxu0 0.0
    %231 = vmatpush1.msra.mxu0 0.0
    %232 = vmatprep.subr.mxu0 0.0
    %233 = vmatpush1.msra.mxu0 0.0
    %234 = vmatprep.subr.mxu0 0.0
    %235 = vmatpush1.msra.mxu0 0.0
    %236 = vmatprep.subr.mxu0 0.0
    %237 = vmatpush1.msra.mxu0 0.0
    %238 = vmatprep.subr.mxu0 0.0
    %239 = vmatpush1.msra.mxu0 0.0
    %240 = vmatprep.subr.mxu0 0.0
    %241 = vmatpush1.msra.mxu0 0.0
    %242 = vmatprep.subr.mxu0 0.0
    %243 = vmatpush1.msra.mxu0 0.0
    %244 = vmatprep.subr.mxu0 0.0
    %245 = vmatpush1.msra.mxu0 0.0
    %246 = vmatprep.subr.mxu0 0.0
    %247 = vmatpush1.msra.mxu0 0.0
    %248 = vmatprep.subr.mxu0 0.0
    %249 = vmatpush1.msra.mxu0 0.0
    %250 = vmatprep.subr.mxu0 0.0
    %251 = vmatpush1.msra.mxu0 0.0
    %252 = vmatprep.subr.mxu0 0.0
    %253 = vmatpush1.msra.mxu0 0.0
    %254 = vmatprep.subr.mxu0 0.0
    %255 = vmatpush1.msra.mxu0 0.0
    %256 = vmatprep.subr.mxu0 0.0
    %257 = vmatpush1.msra.mxu0 0.0
    %258 = vmatprep.subr.mxu0 0.0
    %259 = vmatpush1.msra.mxu0 0.0
    %260 = vmatprep.subr.mxu0 0.0
    %261 = vmatpush1.msra.mxu0 0.0
    %262 = vmatprep.subr.mxu0 0.0
    %263 = vmatpush1.msra.mxu0 0.0
    %264 = vmatprep.subr.mxu0 0.0
    %265 = vmatpush1.msra.mxu0 0.0
    %266 = vmatprep.subr.mxu0 0.0
    %267 = vmatpush1.msra.mxu0 0.0
    %268 = vmatprep.subr.mxu0 0.0
    %269 = vmatpush1.msra.mxu0 0.0
    %270 = vmatprep.subr.mxu0 0.0
    %271 = vmatpush1.msra.mxu0 0.0
    %272 = vmatprep.subr.mxu0 0.0
    %273 = vmatpush1.msra.mxu0 0.0
    %274 = vmatprep.subr.mxu0 0.0
    %275 = vmatpush1.msra.mxu0 0.0
    %276 = vmatprep.subr.mxu0 0.0
    %277 = vmatpush1.msra.mxu0 0.0
    %278 = vmatprep.subr.mxu0 0.0
    %279 = vmatpush1.msra.mxu0 0.0
    %280 = vmatprep.mubr.f32.mxu0 0.0
    %281 = vmatmul.mubr.f32.gmra.mrb[0].mxu0 %v133
    %v282 = vpop.f32.mrb[0].mxu0
    %v283 = vadd.f32 %v214, %v282
    %v284 = vpop.f32.mrb[0].mxu0
    %285 = vdwg.mxu0
    %v286 = vld [vmem:[%s2] sm:$0xff]
    %v287 = vmul.f32 %v283, 0.5
    %v288 = vmul.f32 %v287, 1.442695
    %v289 = vpow.pop %v288
    %v290 = vmul.f32 %v286, %v289
    %v291 = vadd.f32 %v202, %v290
    %293 = vrot.lane.b32.xlu0 %v202, 8
    %v294 = vpop.permute.xlu0 %293
    %297 = vrot.lane.b32.xlu0 %v283, 16
    %v298 = vpop.permute.xlu0 %297
    %v300 = vsel %vm42, %v291, %v294
    %vm301 = vcmask 130048
    %v302 = vsel %vm301, %v300, %v298
    %vm303 = vcmask 195584
    %304 = vst.msk [vmem:[#allocation2] sm:$0xff] %vm303, %v302
    // Predicated region
    $region38: #{tpu_custom_call.1} parent=1 // pred_check
      _
    $region39: #{tpu_custom_call.1} parent=1 // pred_check_branch
      %306 = sbr.rel (0) target = $region41
    $region40: #{tpu_custom_call.1} parent=1 // pred_region
      %s308 = ssub.s32 128, 128
      %309 = vsyncadd [#allocation3], %s308
      %s311 = sshll.u32 [#allocation2], 4
      %s312 = int_to_ptr.vmem [resolvable:$true] %s311
      %314 = dma.vmem_to_hbm [thread:$0]  %s312, 128, %s9, [#allocation3]
    $region41: #{tpu_custom_call.1} parent=1 // pred_fallthru
      _
    // Predicated region
    $region42: #{tpu_custom_call.1} parent=1 // pred_check
      _
    $region43: #{tpu_custom_call.1} parent=1 // pred_check_branch
      %316 = sbr.rel (0) target = $region45
    $region44: #{tpu_custom_call.1} parent=1 // pred_region
      %317 = dma.done [#allocation3], 128
    $region45: #{tpu_custom_call.1} parent=1 // pred_fallthru
      _
    %318 = vsyncpa [#allocation3], 1

</llo_original>
